<compile_context>
chip_gen: v7x
topology: tpu7x:2x2x1
jax: 0.10.0
libtpu: 0.0.40
codegen_flags: <defaults>
</compile_context>

<pallas_src>
import functools

import jax
import jax.numpy as jnp
import numpy as np
from jax import lax
from jax.experimental import pallas as pl
from jax.experimental.pallas import tpu as pltpu


# ---------------------------------------------------------------------------
# Kernel 1: horizontal window max ("rowmax") + per-tile keep-count.
# ---------------------------------------------------------------------------
def _reduce_kernel(noise_ref, rowmax_ref, sums_ref, *, bs, H, W):
    """noise_ref : (Bt, Hp, Wp) int8 0/1 seeds, zero-padded by (bs-1) per side.
    rowmax_ref: (Bt, Hp, W) int8  — horizontal bs-window max of the seeds.
    sums_ref  : (1, 8, 128) f32   — this tile's keep-element count (broadcast).
    """
    nz = noise_ref[...].astype(jnp.float32)          # all math in f32 (v5e-safe)
    rowmax = nz[:, :, 0:W]
    for dx in range(1, bs):                           # bs is tiny -> unrolled
        rowmax = jnp.maximum(rowmax, nz[:, :, dx:dx + W])       # (Bt, Hp, W)
    rowmax_ref[...] = rowmax.astype(rowmax_ref.dtype)

    pooled = rowmax[:, 0:H, :]
    for dy in range(1, bs):
        pooled = jnp.maximum(pooled, rowmax[:, dy:dy + H, :])   # (Bt, H, W)

    # Staged reduction (lane -> sublane -> major).  keep_sum = numel - sum(pooled)
    # is exact even for B-padding rows (seed=1 -> pooled=1 -> contributes 0).
    s = jnp.sum(pooled, axis=2, keepdims=True)
    s = jnp.sum(s, axis=1, keepdims=True)
    s = jnp.sum(s, axis=0, keepdims=True)            # (1, 1, 1)
    keep_sum = float(pooled.shape[0] * H * W) - s
    sums_ref[...] = jnp.broadcast_to(keep_sum, sums_ref.shape)


# ---------------------------------------------------------------------------
# Kernel 2: vertical window max in flat (lane-dense) form + apply mask*scale.
# ---------------------------------------------------------------------------
def _apply_kernel(scale_ref, rowmax_ref, x_ref, o_ref, *, bs, W, HW):
    """scale_ref : (1,) f32 in SMEM.
    rowmax_ref: (Bt, Hp*W) int8 (row-major flat view of call 1's output).
    x_ref/o_ref: (Bt, H*W) — flat so every load/store is lane-dense.
    pooled[p] for p = r*W + c equals max_dy rowmax[(r+dy), c] = rm_flat[p + dy*W].
    """
    rm = rowmax_ref[...].astype(jnp.float32)          # (Bt, Hp*W)
    pooled = rm[:, 0:HW]
    for dy in range(1, bs):
        pooled = jnp.maximum(pooled, rm[:, dy * W: dy * W + HW])  # (Bt, H*W)
    keep = 1.0 - pooled
    scale = scale_ref[0]
    o_ref[...] = (x_ref[...] * keep * scale).astype(o_ref.dtype)


# ---------------------------------------------------------------------------
# Tiling helpers.
# ---------------------------------------------------------------------------
def _per_channel_vmem_bytes(H, W, Hp, Wp):
    """Conservative per-channel VMEM working set (max of the two calls)."""
    HW = H * W
    # apply call: int8 rowmax (x2 buf) + f32 x/out (x2 buf) + f32 temps
    apply_b = 2 * Hp * W + 2 * 4 * HW + 2 * 4 * HW + 4 * Hp * W + 3 * 4 * HW
    # reduce call: int8 noise/rowmax (x2 buf) + f32 temps
    reduce_b = 2 * Hp * Wp + 2 * Hp * W + 4 * Hp * Wp + 4 * Hp * W + 4 * HW
    return max(apply_b, reduce_b)


def _pick_block_tile(B, H, W, Hp, Wp, budget_bytes):
    """Channels per grid step: as large as fits the budget (no divisor-of-B req)."""
    per_b = _per_channel_vmem_bytes(H, W, Hp, Wp)
    cap = max(1, budget_bytes // per_b)
    if B <= cap:
        bt = B
    else:
        bt = max(8, (cap // 8) * 8)                   # sublane-friendly
    # Give the second TensorCore (v7x) something to do when B is large enough.
    if B >= 16 and bt >= B:
        half = -(-B // 2)
        bt = -(-half // 8) * 8
    return bt


# ---------------------------------------------------------------------------
# Wrapper.
# ---------------------------------------------------------------------------
def drop_block2d_pallas(x, noise, *, block_size, eps=1e-6, training=True,
                        vmem_budget_bytes=48 * 1024 * 1024):
    """DropBlock2d forward given pre-drawn Bernoulli seed noise."""
    if not training:
        return x

    N, C, H, W = x.shape
    bs = block_size
    assert bs % 2 == 1, "odd block_size only"  # TODO(synk): even bs not handled
    Hn, Wn = H - bs + 1, W - bs + 1
    assert noise.shape == (N, C, Hn, Wn)

    B, HW = N * C, H * W
    Hp, Wp = H + bs - 1, W + bs - 1
    pad = bs - 1

    # int8 seeds, zero-padded spatially (tiny tensor -> cheap wrapper-side pad).
    noise_i8 = jnp.pad(noise.astype(jnp.int8),
                       ((0, 0), (0, 0), (pad, pad), (pad, pad))).reshape(B, Hp, Wp)
    x2 = x.reshape(B, HW)                             # lane-dense layout for call 2

    # VMEM budget from the actual hardware (v7x: 64 MiB, v5e/v6e: 128 MiB).
    try:
        vmem_cap = int(pltpu.get_tpu_info().vmem_capacity_bytes)
    except Exception:
        vmem_cap = 64 * 1024 * 1024
    budget = min(int(vmem_budget_bytes), (vmem_cap * 5) // 8)

    bt = _pick_block_tile(B, H, W, Hp, Wp, budget)
    Bp = -(-B // bt) * bt
    if Bp != B:
        # Pad channels: seed=1 rows give keep=0 (add nothing to the sum); x=0.
        noise_i8 = jnp.concatenate(
            [noise_i8, jnp.ones((Bp - B, Hp, Wp), jnp.int8)], axis=0)
        x2 = jnp.concatenate(
            [x2, jnp.zeros((Bp - B, HW), x.dtype)], axis=0)
    num_tiles = Bp // bt

    ws = _per_channel_vmem_bytes(H, W, Hp, Wp) * bt
    vmem_limit = int(min(max(2 * ws, 8 * 1024 * 1024),
                         max(vmem_cap - 8 * 1024 * 1024, 8 * 1024 * 1024)))
    cparams = pltpu.CompilerParams(dimension_semantics=("parallel",),
                                   vmem_limit_bytes=vmem_limit)

    # ---- call 1: horizontal window max + per-tile keep counts -----------------
    reduce_k = functools.partial(_reduce_kernel, bs=bs, H=H, W=W)
    rowmax_i8, partials = pl.pallas_call(
        reduce_k,
        out_shape=(jax.ShapeDtypeStruct((Bp, Hp, W), jnp.int8),
                   jax.ShapeDtypeStruct((num_tiles, 8, 128), jnp.float32)),
        grid=(num_tiles,),
        in_specs=[pl.BlockSpec((bt, Hp, Wp), lambda t: (t, 0, 0))],
        out_specs=(pl.BlockSpec((bt, Hp, W), lambda t: (t, 0, 0)),
                   pl.BlockSpec((1, 8, 128), lambda t: (t, 0, 0))),
        compiler_params=cparams,
    )(noise_i8)

    keep_total = jnp.sum(partials[:, 0, 0])
    numel = float(N * C * H * W)
    scale = (numel / (eps + keep_total)).astype(jnp.float32).reshape(1)

    # ---- call 2: vertical window max (flat) + apply keep*scale ----------------
    rm_flat = rowmax_i8.reshape(Bp, Hp * W)           # contiguous reshape, no copy
    apply_k = functools.partial(_apply_kernel, bs=bs, W=W, HW=HW)
    out = pl.pallas_call(
        apply_k,
        out_shape=jax.ShapeDtypeStruct((Bp, HW), x.dtype),
        grid=(num_tiles,),
        in_specs=[pl.BlockSpec(memory_space=pltpu.MemorySpace.SMEM),
                  pl.BlockSpec((bt, Hp * W), lambda t: (t, 0)),
                  pl.BlockSpec((bt, HW), lambda t: (t, 0))],
        out_specs=pl.BlockSpec((bt, HW), lambda t: (t, 0)),
        compiler_params=cparams,
    )(scale, rm_flat, x2)

    return out[:B].reshape(N, C, H, W)


# ---------------------------------------------------------------------------
# Plain-JAX reference (exact torchvision drop_block2d form).
# ---------------------------------------------------------------------------
def drop_block2d_ref(x, noise, *, block_size, eps=1e-6, training=True):
    if not training:
        return x
    N, C, H, W = x.shape
    bs = block_size
    pad = bs // 2
    noise_f = noise.astype(x.dtype)
    noise_p = jnp.pad(noise_f, ((0, 0), (0, 0), (pad, pad), (pad, pad)))
    pooled = lax.reduce_window(noise_p, 0.0, lax.max,
                               window_dimensions=(1, 1, bs, bs),
                               window_strides=(1, 1, 1, 1),
                               padding=((0, 0), (0, 0), (pad, pad), (pad, pad)))
    mask = 1.0 - pooled
    scale = mask.size / (eps + jnp.sum(mask))
    return x * mask * scale


if __name__ == "__main__":
    key = jax.random.PRNGKey(0)
    N, C, H, W = 2, 4, 16, 16
    block_size = 3
    p_drop = 0.5
    eps = 1e-6

    kx, kn = jax.random.split(key)
    x = jax.random.normal(kx, (N, C, H, W), jnp.float32)

    # DropBlock2d's internal Bernoulli draw (host-side for verifiability).
    gamma = (p_drop * H * W) / ((block_size ** 2) *
                                ((H - block_size + 1) * (W - block_size + 1)))
    noise = jax.random.bernoulli(
        kn, gamma,
        (N, C, H - block_size + 1, W - block_size + 1)).astype(jnp.float32)

    out = drop_block2d_pallas(x, noise, block_size=block_size, eps=eps,
                              training=True)
    out = jax.block_until_ready(out)

    ref = drop_block2d_ref(x, noise, block_size=block_size, eps=eps,
                           training=True)
    np.testing.assert_allclose(np.asarray(out), np.asarray(ref),
                               rtol=1e-5, atol=1e-5)
    print("KERNEL_OK")
</pallas_src>

<mosaic_0001>
module attributes {stable_mosaic.version = 11 : i64} {
  func.func @_reduce_kernel(%arg0: i32, %arg1: memref<8x18x18xi8, #tpu.memory_space<vmem>>, %arg2: memref<8x18x16xi8, #tpu.memory_space<vmem>>, %arg3: memref<1x8x128xf32, #tpu.memory_space<vmem>>) attributes {dimension_semantics = [#tpu.dimension_semantics<parallel>], iteration_bounds = array<i64: 1>, scalar_prefetch = 0 : i64, scratch_operands = 0 : i64, tpu.core_type = #tpu.core_type<tc>, window_params = [{transform_indices = @transform_0, window_bounds = array<i64: 8, 18, 18>}, {transform_indices = @transform_1, window_bounds = array<i64: 8, 18, 16>}, {transform_indices = @transform_2, window_bounds = array<i64: 1, 8, 128>}]} {
    %c0 = arith.constant 0 : index
    %c0_0 = arith.constant 0 : index
    %c0_1 = arith.constant 0 : index
    %0 = vector.load %arg1[%c0, %c0_0, %c0_1] : memref<8x18x18xi8, #tpu.memory_space<vmem>>, vector<8x18x18xi8>
    %1 = arith.sitofp %0 : vector<8x18x18xi8> to vector<8x18x18xf32>
    %2 = vector.extract_strided_slice %1 {offsets = [0, 0, 0], sizes = [8, 18, 16], strides = [1, 1, 1]} : vector<8x18x18xf32> to vector<8x18x16xf32>
    %3 = vector.extract_strided_slice %1 {offsets = [0, 0, 1], sizes = [8, 18, 16], strides = [1, 1, 1]} : vector<8x18x18xf32> to vector<8x18x16xf32>
    %4 = arith.maximumf %2, %3 : vector<8x18x16xf32>
    %5 = vector.extract_strided_slice %1 {offsets = [0, 0, 2], sizes = [8, 18, 16], strides = [1, 1, 1]} : vector<8x18x18xf32> to vector<8x18x16xf32>
    %6 = arith.maximumf %4, %5 : vector<8x18x16xf32>
    %7 = arith.fptosi %6 : vector<8x18x16xf32> to vector<8x18x16xi8>
    %c0_2 = arith.constant 0 : index
    %c0_3 = arith.constant 0 : index
    %c0_4 = arith.constant 0 : index
    %8 = vector.load %arg2[%c0_2, %c0_3, %c0_4] : memref<8x18x16xi8, #tpu.memory_space<vmem>>, vector<8x18x16xi8>
    tpu.vector_store %arg2[%c0_2, %c0_3, %c0_4], %7 {strides = array<i32>} : memref<8x18x16xi8, #tpu.memory_space<vmem>>, vector<8x18x16xi8>,
    %9 = vector.extract_strided_slice %6 {offsets = [0, 0, 0], sizes = [8, 16, 16], strides = [1, 1, 1]} : vector<8x18x16xf32> to vector<8x16x16xf32>
    %10 = vector.extract_strided_slice %6 {offsets = [0, 1, 0], sizes = [8, 16, 16], strides = [1, 1, 1]} : vector<8x18x16xf32> to vector<8x16x16xf32>
    %11 = arith.maximumf %9, %10 : vector<8x16x16xf32>
    %12 = vector.extract_strided_slice %6 {offsets = [0, 2, 0], sizes = [8, 16, 16], strides = [1, 1, 1]} : vector<8x18x16xf32> to vector<8x16x16xf32>
    %13 = arith.maximumf %11, %12 : vector<8x16x16xf32>
    %cst = arith.constant dense<0.000000e+00> : vector<8x16xf32>
    %14 = vector.multi_reduction <add>, %13, %cst [2] : vector<8x16x16xf32> to vector<8x16xf32>
    %15 = vector.shape_cast %14 : vector<8x16xf32> to vector<8x16x1xf32>
    %cst_5 = arith.constant dense<0.000000e+00> : vector<8x1xf32>
    %16 = vector.multi_reduction <add>, %15, %cst_5 [1] : vector<8x16x1xf32> to vector<8x1xf32>
    %17 = vector.shape_cast %16 : vector<8x1xf32> to vector<8x1x1xf32>
    %cst_6 = arith.constant dense<0.000000e+00> : vector<1x1xf32>
    %18 = vector.multi_reduction <add>, %17, %cst_6 [0] : vector<8x1x1xf32> to vector<1x1xf32>
    %19 = vector.shape_cast %18 : vector<1x1xf32> to vector<1x1x1xf32>
    %cst_7 = arith.constant 2.048000e+03 : f32
    %20 = vector.broadcast %cst_7 : f32 to vector<1x1x1xf32>
    %21 = arith.subf %20, %19 : vector<1x1x1xf32>
    %22 = vector.shape_cast %21 : vector<1x1x1xf32> to vector<1x1x1xf32>
    %23 = vector.broadcast %22 : vector<1x1x1xf32> to vector<1x8x128xf32>
    %c0_8 = arith.constant 0 : index
    %c0_9 = arith.constant 0 : index
    %c0_10 = arith.constant 0 : index
    %24 = vector.load %arg3[%c0_8, %c0_9, %c0_10] : memref<1x8x128xf32, #tpu.memory_space<vmem>>, vector<1x8x128xf32>
    tpu.vector_store %arg3[%c0_8, %c0_9, %c0_10], %23 {strides = array<i32>} : memref<1x8x128xf32, #tpu.memory_space<vmem>>, vector<1x8x128xf32>,
    return
  }
  func.func @transform_0(%arg0: i32) -> (i32, i32, i32) {
    %c0_i32 = arith.constant 0 : i32
    %c0_i32_0 = arith.constant 0 : i32
    %c0_i32_1 = arith.constant 0 : i32
    return %arg0, %c0_i32, %c0_i32_0 : i32, i32, i32
  }
  func.func @transform_1(%arg0: i32) -> (i32, i32, i32) {
    %c0_i32 = arith.constant 0 : i32
    %c0_i32_0 = arith.constant 0 : i32
    %c0_i32_1 = arith.constant 0 : i32
    return %arg0, %c0_i32, %c0_i32_0 : i32, i32, i32
  }
  func.func @transform_2(%arg0: i32) -> (i32, i32, i32) {
    %c0_i32 = arith.constant 0 : i32
    %c0_i32_0 = arith.constant 0 : i32
    %c0_i32_1 = arith.constant 0 : i32
    return %arg0, %c0_i32, %c0_i32_0 : i32, i32, i32
  }
}

</mosaic_0001>

<llo_original>
// kernel: tpu_custom_call.1
$region0: #{tpu_custom_call.1}
  #allocation0 [shape = 'u32[]', space=smem, size = 0x4, offset = 0x4, fixed_abs, tag = 'smem constant byte address 0x4 - core index']
  #allocation1 [shape = 'u32[144,128]{1,0:T(1,128)}', space=vmem, size = 0x12000, scoped, tag = 'internal scratch']
  %s0 = inlined_call_operand.vmem [shape: s8[8,18,18], index: 0, kind: input, shape index: {}]
  %s1 = inlined_call_operand.vmem [shape: s8[8,18,16], index: 1, kind: output, shape index: {0}]
  %s2 = inlined_call_operand.hbm [shape: f32[1,8,128], index: 2, kind: output, shape index: {1}]
  %3 = xla_tuple %s1, %s2
  %s4 = sld [smem:[#allocation0]]
  $region22: #{tpu_custom_call.1} parent=0
    _
  %s6 = ssub.s32 1, %s4
  %s7 = scalar_select 0, %s6, %s4
  $region1: #{tpu_custom_call.1} parent=0
    #allocation2 [shape = 'u8[4096]{0}', space=vmem, size = 0x1000, scoped, tag = 'output window, operand 1, single buffered']
    #allocation3 [shape = 's32[1]{0}', space=sflag, size = 0x4, scoped, tag = 'scoped memory for tpu_custom_call.1']
    %8 = vsyncpa [#allocation3], 0
    // Predicated region
    $region2: #{tpu_custom_call.1} parent=1 // pred_check
      _
    $region3: #{tpu_custom_call.1} parent=1 // pred_check_branch
      %10 = sbr.rel (0) target = $region5
    $region4: #{tpu_custom_call.1} parent=1 // pred_region
      _
    $region5: #{tpu_custom_call.1} parent=1 // pred_fallthru
      _
    %v11 = vld [vmem:[%s0] sm:$0x3]
    %v12 = vld [vmem:[%s0 + $0x2] sm:$0x3]
    %v13 = vld [vmem:[%s0 + $0x4] sm:$0x1]
    %v14 = vld [vmem:[%s0 + $0x6] sm:$0x3]
    %v15 = vld [vmem:[%s0 + $0x8] sm:$0x3]
    %v16 = vld [vmem:[%s0 + $0xa] sm:$0x1]
    %v17 = vld [vmem:[%s0 + $0xc] sm:$0x3]
    %v18 = vld [vmem:[%s0 + $0xe] sm:$0x3]
    %v19 = vld [vmem:[%s0 + $0x10] sm:$0x1]
    %v20 = vld [vmem:[%s0 + $0x12] sm:$0x3]
    %v21 = vld [vmem:[%s0 + $0x14] sm:$0x3]
    %v22 = vld [vmem:[%s0 + $0x16] sm:$0x1]
    %v23 = vld [vmem:[%s0 + $0x18] sm:$0x3]
    %v24 = vld [vmem:[%s0 + $0x1a] sm:$0x3]
    %v25 = vld [vmem:[%s0 + $0x1c] sm:$0x1]
    %v26 = vld [vmem:[%s0 + $0x1e] sm:$0x3]
    %v27 = vld [vmem:[%s0 + $0x20] sm:$0x3]
    %v28 = vld [vmem:[%s0 + $0x22] sm:$0x1]
    %v29 = vld [vmem:[%s0 + $0x24] sm:$0x3]
    %v30 = vld [vmem:[%s0 + $0x26] sm:$0x3]
    %v31 = vld [vmem:[%s0 + $0x28] sm:$0x1]
    %v32 = vld [vmem:[%s0 + $0x2a] sm:$0x3]
    %v33 = vld [vmem:[%s0 + $0x2c] sm:$0x3]
    %v34 = vld [vmem:[%s0 + $0x2e] sm:$0x1]
    %v35 = vunpack.c.0.s8 %v11
    %v36 = vunpack.c.0.s8 %v12
    %v37 = vunpack.c.0.s8 %v13
    %v38 = vunpack.c.0.s8 %v14
    %v39 = vunpack.c.0.s8 %v15
    %v40 = vunpack.c.0.s8 %v16
    %v41 = vunpack.c.0.s8 %v17
    %v42 = vunpack.c.0.s8 %v18
    %v43 = vunpack.c.0.s8 %v19
    %v44 = vunpack.c.0.s8 %v20
    %v45 = vunpack.c.0.s8 %v21
    %v46 = vunpack.c.0.s8 %v22
    %v47 = vunpack.c.0.s8 %v23
    %v48 = vunpack.c.0.s8 %v24
    %v49 = vunpack.c.0.s8 %v25
    %v50 = vunpack.c.0.s8 %v26
    %v51 = vunpack.c.0.s8 %v27
    %v52 = vunpack.c.0.s8 %v28
    %v53 = vunpack.c.0.s8 %v29
    %v54 = vunpack.c.0.s8 %v30
    %v55 = vunpack.c.0.s8 %v31
    %v56 = vunpack.c.0.s8 %v32
    %v57 = vunpack.c.0.s8 %v33
    %v58 = vunpack.c.0.s8 %v34
    %v59 = vcvt.s32.f32 %v35
    %v60 = vcvt.s32.f32 %v36
    %v61 = vcvt.s32.f32 %v37
    %v62 = vcvt.s32.f32 %v38
    %v63 = vcvt.s32.f32 %v39
    %v64 = vcvt.s32.f32 %v40
    %v65 = vcvt.s32.f32 %v41
    %v66 = vcvt.s32.f32 %v42
    %v67 = vcvt.s32.f32 %v43
    %v68 = vcvt.s32.f32 %v44
    %v69 = vcvt.s32.f32 %v45
    %v70 = vcvt.s32.f32 %v46
    %v71 = vcvt.s32.f32 %v47
    %v72 = vcvt.s32.f32 %v48
    %v73 = vcvt.s32.f32 %v49
    %v74 = vcvt.s32.f32 %v50
    %v75 = vcvt.s32.f32 %v51
    %v76 = vcvt.s32.f32 %v52
    %v77 = vcvt.s32.f32 %v53
    %v78 = vcvt.s32.f32 %v54
    %v79 = vcvt.s32.f32 %v55
    %v80 = vcvt.s32.f32 %v56
    %v81 = vcvt.s32.f32 %v57
    %v82 = vcvt.s32.f32 %v58
    %107 = vrot.lane.b32.xlu0 %v59, 127
    %v108 = vpop.permute.xlu0 %107
    %109 = vrot.lane.b32.xlu0 %v60, 127
    %v110 = vpop.permute.xlu0 %109
    %111 = vrot.lane.b32.xlu0 %v61, 127
    %v112 = vpop.permute.xlu0 %111
    %113 = vrot.lane.b32.xlu0 %v62, 127
    %v114 = vpop.permute.xlu0 %113
    %115 = vrot.lane.b32.xlu0 %v63, 127
    %v116 = vpop.permute.xlu0 %115
    %117 = vrot.lane.b32.xlu0 %v64, 127
    %v118 = vpop.permute.xlu0 %117
    %119 = vrot.lane.b32.xlu0 %v65, 127
    %v120 = vpop.permute.xlu0 %119
    %121 = vrot.lane.b32.xlu0 %v66, 127
    %v122 = vpop.permute.xlu0 %121
    %123 = vrot.lane.b32.xlu0 %v67, 127
    %v124 = vpop.permute.xlu0 %123
    %125 = vrot.lane.b32.xlu0 %v68, 127
    %v126 = vpop.permute.xlu0 %125
    %127 = vrot.lane.b32.xlu0 %v69, 127
    %v128 = vpop.permute.xlu0 %127
    %129 = vrot.lane.b32.xlu0 %v70, 127
    %v130 = vpop.permute.xlu0 %129
    %131 = vrot.lane.b32.xlu0 %v71, 127
    %v132 = vpop.permute.xlu0 %131
    %133 = vrot.lane.b32.xlu0 %v72, 127
    %v134 = vpop.permute.xlu0 %133
    %135 = vrot.lane.b32.xlu0 %v73, 127
    %v136 = vpop.permute.xlu0 %135
    %137 = vrot.lane.b32.xlu0 %v74, 127
    %v138 = vpop.permute.xlu0 %137
    %139 = vrot.lane.b32.xlu0 %v75, 127
    %v140 = vpop.permute.xlu0 %139
    %141 = vrot.lane.b32.xlu0 %v76, 127
    %v142 = vpop.permute.xlu0 %141
    %143 = vrot.lane.b32.xlu0 %v77, 127
    %v144 = vpop.permute.xlu0 %143
    %145 = vrot.lane.b32.xlu0 %v78, 127
    %v146 = vpop.permute.xlu0 %145
    %147 = vrot.lane.b32.xlu0 %v79, 127
    %v148 = vpop.permute.xlu0 %147
    %149 = vrot.lane.b32.xlu0 %v80, 127
    %v150 = vpop.permute.xlu0 %149
    %151 = vrot.lane.b32.xlu0 %v81, 127
    %v152 = vpop.permute.xlu0 %151
    %153 = vrot.lane.b32.xlu0 %v82, 127
    %v154 = vpop.permute.xlu0 %153
    %v179 = vmax.f32 %v59, %v108
    %v180 = vmax.f32 %v60, %v110
    %v181 = vmax.f32 %v61, %v112
    %v182 = vmax.f32 %v62, %v114
    %v183 = vmax.f32 %v63, %v116
    %v184 = vmax.f32 %v64, %v118
    %v185 = vmax.f32 %v65, %v120
    %v186 = vmax.f32 %v66, %v122
    %v187 = vmax.f32 %v67, %v124
    %v188 = vmax.f32 %v68, %v126
    %v189 = vmax.f32 %v69, %v128
    %v190 = vmax.f32 %v70, %v130
    %v191 = vmax.f32 %v71, %v132
    %v192 = vmax.f32 %v72, %v134
    %v193 = vmax.f32 %v73, %v136
    %v194 = vmax.f32 %v74, %v138
    %v195 = vmax.f32 %v75, %v140
    %v196 = vmax.f32 %v76, %v142
    %v197 = vmax.f32 %v77, %v144
    %v198 = vmax.f32 %v78, %v146
    %v199 = vmax.f32 %v79, %v148
    %v200 = vmax.f32 %v80, %v150
    %v201 = vmax.f32 %v81, %v152
    %v202 = vmax.f32 %v82, %v154
    %203 = vrot.lane.b32.xlu0 %v59, 126
    %v204 = vpop.permute.xlu0 %203
    %205 = vrot.lane.b32.xlu0 %v60, 126
    %v206 = vpop.permute.xlu0 %205
    %207 = vrot.lane.b32.xlu0 %v61, 126
    %v208 = vpop.permute.xlu0 %207
    %209 = vrot.lane.b32.xlu0 %v62, 126
    %v210 = vpop.permute.xlu0 %209
    %211 = vrot.lane.b32.xlu0 %v63, 126
    %v212 = vpop.permute.xlu0 %211
    %213 = vrot.lane.b32.xlu0 %v64, 126
    %v214 = vpop.permute.xlu0 %213
    %215 = vrot.lane.b32.xlu0 %v65, 126
    %v216 = vpop.permute.xlu0 %215
    %217 = vrot.lane.b32.xlu0 %v66, 126
    %v218 = vpop.permute.xlu0 %217
    %219 = vrot.lane.b32.xlu0 %v67, 126
    %v220 = vpop.permute.xlu0 %219
    %221 = vrot.lane.b32.xlu0 %v68, 126
    %v222 = vpop.permute.xlu0 %221
    %223 = vrot.lane.b32.xlu0 %v69, 126
    %v224 = vpop.permute.xlu0 %223
    %225 = vrot.lane.b32.xlu0 %v70, 126
    %v226 = vpop.permute.xlu0 %225
    %227 = vrot.lane.b32.xlu0 %v71, 126
    %v228 = vpop.permute.xlu0 %227
    %229 = vrot.lane.b32.xlu0 %v72, 126
    %v230 = vpop.permute.xlu0 %229
    %231 = vrot.lane.b32.xlu0 %v73, 126
    %v232 = vpop.permute.xlu0 %231
    %233 = vrot.lane.b32.xlu0 %v74, 126
    %v234 = vpop.permute.xlu0 %233
    %235 = vrot.lane.b32.xlu0 %v75, 126
    %v236 = vpop.permute.xlu0 %235
    %237 = vrot.lane.b32.xlu0 %v76, 126
    %v238 = vpop.permute.xlu0 %237
    %239 = vrot.lane.b32.xlu0 %v77, 126
    %v240 = vpop.permute.xlu0 %239
    %241 = vrot.lane.b32.xlu0 %v78, 126
    %v242 = vpop.permute.xlu0 %241
    %243 = vrot.lane.b32.xlu0 %v79, 126
    %v244 = vpop.permute.xlu0 %243
    %245 = vrot.lane.b32.xlu0 %v80, 126
    %v246 = vpop.permute.xlu0 %245
    %247 = vrot.lane.b32.xlu0 %v81, 126
    %v248 = vpop.permute.xlu0 %247
    %249 = vrot.lane.b32.xlu0 %v82, 126
    %v250 = vpop.permute.xlu0 %249
    %v275 = vmax.f32 %v179, %v204
    %v276 = vmax.f32 %v180, %v206
    %v277 = vmax.f32 %v181, %v208
    %v278 = vmax.f32 %v182, %v210
    %v279 = vmax.f32 %v183, %v212
    %v280 = vmax.f32 %v184, %v214
    %v281 = vmax.f32 %v185, %v216
    %v282 = vmax.f32 %v186, %v218
    %v283 = vmax.f32 %v187, %v220
    %v284 = vmax.f32 %v188, %v222
    %v285 = vmax.f32 %v189, %v224
    %v286 = vmax.f32 %v190, %v226
    %v287 = vmax.f32 %v191, %v228
    %v288 = vmax.f32 %v192, %v230
    %v289 = vmax.f32 %v193, %v232
    %v290 = vmax.f32 %v194, %v234
    %v291 = vmax.f32 %v195, %v236
    %v292 = vmax.f32 %v196, %v238
    %v293 = vmax.f32 %v197, %v240
    %v294 = vmax.f32 %v198, %v242
    %v295 = vmax.f32 %v199, %v244
    %v296 = vmax.f32 %v200, %v246
    %v297 = vmax.f32 %v201, %v248
    %v298 = vmax.f32 %v202, %v250
    %v299 = vtrunc.f32 %v275
    %v300 = vtrunc.f32 %v276
    %v301 = vtrunc.f32 %v277
    %v302 = vtrunc.f32 %v278
    %v303 = vtrunc.f32 %v279
    %v304 = vtrunc.f32 %v280
    %v305 = vtrunc.f32 %v281
    %v306 = vtrunc.f32 %v282
    %v307 = vtrunc.f32 %v283
    %v308 = vtrunc.f32 %v284
    %v309 = vtrunc.f32 %v285
    %v310 = vtrunc.f32 %v286
    %v311 = vtrunc.f32 %v287
    %v312 = vtrunc.f32 %v288
    %v313 = vtrunc.f32 %v289
    %v314 = vtrunc.f32 %v290
    %v315 = vtrunc.f32 %v291
    %v316 = vtrunc.f32 %v292
    %v317 = vtrunc.f32 %v293
    %v318 = vtrunc.f32 %v294
    %v319 = vtrunc.f32 %v295
    %v320 = vtrunc.f32 %v296
    %v321 = vtrunc.f32 %v297
    %v322 = vtrunc.f32 %v298
    %v323 = vpack.c.f32.eXmY %v299, %v300, 312
    %v327 = vpack.c.f32.eXmY %v301, %v301, 312
    %v331 = vpack.c.b8 %v327, %v323
    %v333 = vpack.c.f32.eXmY %v302, %v303, 312
    %v337 = vpack.c.f32.eXmY %v304, %v304, 312
    %v341 = vpack.c.b8 %v337, %v333
    %v343 = vpack.c.f32.eXmY %v305, %v306, 312
    %v347 = vpack.c.f32.eXmY %v307, %v307, 312
    %v351 = vpack.c.b8 %v347, %v343
    %v353 = vpack.c.f32.eXmY %v308, %v309, 312
    %v357 = vpack.c.f32.eXmY %v310, %v310, 312
    %v361 = vpack.c.b8 %v357, %v353
    %v363 = vpack.c.f32.eXmY %v311, %v312, 312
    %v367 = vpack.c.f32.eXmY %v313, %v313, 312
    %v371 = vpack.c.b8 %v367, %v363
    %v373 = vpack.c.f32.eXmY %v314, %v315, 312
    %v377 = vpack.c.f32.eXmY %v316, %v316, 312
    %v381 = vpack.c.b8 %v377, %v373
    %v383 = vpack.c.f32.eXmY %v317, %v318, 312
    %v387 = vpack.c.f32.eXmY %v319, %v319, 312
    %v391 = vpack.c.b8 %v387, %v383
    %v393 = vpack.c.f32.eXmY %v320, %v321, 312
    %v397 = vpack.c.f32.eXmY %v322, %v322, 312
    %v401 = vpack.c.b8 %v397, %v393
    %v403 = vunpack.c.0.s8 %v331
    %v404 = vunpack.c.1.s8 %v331
    %v405 = vunpack.c.2.s8 %v331
    %v406 = vunpack.c.0.s8 %v341
    %v407 = vunpack.c.1.s8 %v341
    %v408 = vunpack.c.2.s8 %v341
    %v409 = vunpack.c.0.s8 %v351
    %v410 = vunpack.c.1.s8 %v351
    %v411 = vunpack.c.2.s8 %v351
    %v412 = vunpack.c.0.s8 %v361
    %v413 = vunpack.c.1.s8 %v361
    %v414 = vunpack.c.2.s8 %v361
    %v415 = vunpack.c.0.s8 %v371
    %v416 = vunpack.c.1.s8 %v371
    %v417 = vunpack.c.2.s8 %v371
    %v418 = vunpack.c.0.s8 %v381
    %v419 = vunpack.c.1.s8 %v381
    %v420 = vunpack.c.2.s8 %v381
    %v421 = vunpack.c.0.s8 %v391
    %v422 = vunpack.c.1.s8 %v391
    %v423 = vunpack.c.2.s8 %v391
    %v424 = vunpack.c.0.s8 %v401
    %v425 = vunpack.c.1.s8 %v401
    %v426 = vunpack.c.2.s8 %v401
    %v427 = vpack.c.b16 %v403, %v403
    %v428 = vpack.c.b8 %v427, %v427
    %v429 = vpack.c.b16 %v404, %v404
    %v430 = vpack.c.b8 %v429, %v429
    %v431 = vpack.c.b16 %v405, %v405
    %v432 = vpack.c.b8 %v431, %v431
    %v433 = vpack.c.b16 %v406, %v406
    %v434 = vpack.c.b8 %v433, %v433
    %v435 = vpack.c.b16 %v407, %v407
    %v436 = vpack.c.b8 %v435, %v435
    %v437 = vpack.c.b16 %v408, %v408
    %v438 = vpack.c.b8 %v437, %v437
    %v439 = vpack.c.b16 %v409, %v409
    %v440 = vpack.c.b8 %v439, %v439
    %v441 = vpack.c.b16 %v410, %v410
    %v442 = vpack.c.b8 %v441, %v441
    %v443 = vpack.c.b16 %v411, %v411
    %v444 = vpack.c.b8 %v443, %v443
    %v445 = vpack.c.b16 %v412, %v412
    %v446 = vpack.c.b8 %v445, %v445
    %v447 = vpack.c.b16 %v413, %v413
    %v448 = vpack.c.b8 %v447, %v447
    %v449 = vpack.c.b16 %v414, %v414
    %v450 = vpack.c.b8 %v449, %v449
    %v451 = vpack.c.b16 %v415, %v415
    %v452 = vpack.c.b8 %v451, %v451
    %v453 = vpack.c.b16 %v416, %v416
    %v454 = vpack.c.b8 %v453, %v453
    %v455 = vpack.c.b16 %v417, %v417
    %v456 = vpack.c.b8 %v455, %v455
    %v457 = vpack.c.b16 %v418, %v418
    %v458 = vpack.c.b8 %v457, %v457
    %v459 = vpack.c.b16 %v419, %v419
    %v460 = vpack.c.b8 %v459, %v459
    %v461 = vpack.c.b16 %v420, %v420
    %v462 = vpack.c.b8 %v461, %v461
    %v463 = vpack.c.b16 %v421, %v421
    %v464 = vpack.c.b8 %v463, %v463
    %v465 = vpack.c.b16 %v422, %v422
    %v466 = vpack.c.b8 %v465, %v465
    %v467 = vpack.c.b16 %v423, %v423
    %v468 = vpack.c.b8 %v467, %v467
    %v469 = vpack.c.b16 %v424, %v424
    %v470 = vpack.c.b8 %v469, %v469
    %v471 = vpack.c.b16 %v425, %v425
    %v472 = vpack.c.b8 %v471, %v471
    %v473 = vpack.c.b16 %v426, %v426
    %v474 = vpack.c.b8 %v473, %v473
    %vm475 = vcmask 123904
    %476 = vst.msk [vmem:[%s1] sm:$0x3] %vm475, %v428
    %477 = vst.msk [vmem:[%s1 + $0x2] sm:$0x3] %vm475, %v430
    %vm478 = vcmask 122880
    %vm479 = vsmask.f32 256
    %vm480 = vmand %vm478, %vm479
    %v481 = vld [vmem:[%s1 + $0x4] sm:$0x1]
    %v482 = vsel %vm480, %v432, %v481
    %483 = vst [vmem:[%s1 + $0x4] sm:$0x1] %v482
    %484 = vst.msk [vmem:[%s1 + $0x6] sm:$0x3] %vm475, %v434
    %485 = vst.msk [vmem:[%s1 + $0x8] sm:$0x3] %vm475, %v436
    %v486 = vld [vmem:[%s1 + $0xa] sm:$0x1]
    %v487 = vsel %vm480, %v438, %v486
    %488 = vst [vmem:[%s1 + $0xa] sm:$0x1] %v487
    %489 = vst.msk [vmem:[%s1 + $0xc] sm:$0x3] %vm475, %v440
    %490 = vst.msk [vmem:[%s1 + $0xe] sm:$0x3] %vm475, %v442
    %v491 = vld [vmem:[%s1 + $0x10] sm:$0x1]
    %v492 = vsel %vm480, %v444, %v491
    %493 = vst [vmem:[%s1 + $0x10] sm:$0x1] %v492
    %494 = vst.msk [vmem:[%s1 + $0x12] sm:$0x3] %vm475, %v446
    %495 = vst.msk [vmem:[%s1 + $0x14] sm:$0x3] %vm475, %v448
    %v496 = vld [vmem:[%s1 + $0x16] sm:$0x1]
    %v497 = vsel %vm480, %v450, %v496
    %498 = vst [vmem:[%s1 + $0x16] sm:$0x1] %v497
    %499 = vst.msk [vmem:[%s1 + $0x18] sm:$0x3] %vm475, %v452
    %500 = vst.msk [vmem:[%s1 + $0x1a] sm:$0x3] %vm475, %v454
    %v501 = vld [vmem:[%s1 + $0x1c] sm:$0x1]
    %v502 = vsel %vm480, %v456, %v501
    %503 = vst [vmem:[%s1 + $0x1c] sm:$0x1] %v502
    %504 = vst.msk [vmem:[%s1 + $0x1e] sm:$0x3] %vm475, %v458
    %505 = vst.msk [vmem:[%s1 + $0x20] sm:$0x3] %vm475, %v460
    %v506 = vld [vmem:[%s1 + $0x22] sm:$0x1]
    %v507 = vsel %vm480, %v462, %v506
    %508 = vst [vmem:[%s1 + $0x22] sm:$0x1] %v507
    %509 = vst.msk [vmem:[%s1 + $0x24] sm:$0x3] %vm475, %v464
    %510 = vst.msk [vmem:[%s1 + $0x26] sm:$0x3] %vm475, %v466
    %v511 = vld [vmem:[%s1 + $0x28] sm:$0x1]
    %v512 = vsel %vm480, %v468, %v511
    %513 = vst [vmem:[%s1 + $0x28] sm:$0x1] %v512
    %514 = vst.msk [vmem:[%s1 + $0x2a] sm:$0x3] %vm475, %v470
    %515 = vst.msk [vmem:[%s1 + $0x2c] sm:$0x3] %vm475, %v472
    %v516 = vld [vmem:[%s1 + $0x2e] sm:$0x1]
    %v517 = vsel %vm480, %v474, %v516
    %518 = vst [vmem:[%s1 + $0x2e] sm:$0x1] %v517
    %vm543 = vcmask 1046528
    %v544 = vrot.slane %v275, 1
    %v545 = vrot.slane %v276, 1
    %v546 = vsel %vm543, %v544, %v545
    %v547 = vrot.slane %v277, 1
    %v548 = vsel %vm543, %v545, %v547
    %v549 = vrot.slane %v278, 1
    %v550 = vrot.slane %v279, 1
    %v551 = vsel %vm543, %v549, %v550
    %v552 = vrot.slane %v280, 1
    %v553 = vsel %vm543, %v550, %v552
    %v554 = vrot.slane %v281, 1
    %v555 = vrot.slane %v282, 1
    %v556 = vsel %vm543, %v554, %v555
    %v557 = vrot.slane %v283, 1
    %v558 = vsel %vm543, %v555, %v557
    %v559 = vrot.slane %v284, 1
    %v560 = vrot.slane %v285, 1
    %v561 = vsel %vm543, %v559, %v560
    %v562 = vrot.slane %v286, 1
    %v563 = vsel %vm543, %v560, %v562
    %v564 = vrot.slane %v287, 1
    %v565 = vrot.slane %v288, 1
    %v566 = vsel %vm543, %v564, %v565
    %v567 = vrot.slane %v289, 1
    %v568 = vsel %vm543, %v565, %v567
    %v569 = vrot.slane %v290, 1
    %v570 = vrot.slane %v291, 1
    %v571 = vsel %vm543, %v569, %v570
    %v572 = vrot.slane %v292, 1
    %v573 = vsel %vm543, %v570, %v572
    %v574 = vrot.slane %v293, 1
    %v575 = vrot.slane %v294, 1
    %v576 = vsel %vm543, %v574, %v575
    %v577 = vrot.slane %v295, 1
    %v578 = vsel %vm543, %v575, %v577
    %v579 = vrot.slane %v296, 1
    %v580 = vrot.slane %v297, 1
    %v581 = vsel %vm543, %v579, %v580
    %v582 = vrot.slane %v298, 1
    %v583 = vsel %vm543, %v580, %v582
    %v600 = vmax.f32 %v275, %v546
    %v601 = vmax.f32 %v276, %v548
    %v602 = vmax.f32 %v278, %v551
    %v603 = vmax.f32 %v279, %v553
    %v604 = vmax.f32 %v281, %v556
    %v605 = vmax.f32 %v282, %v558
    %v606 = vmax.f32 %v284, %v561
    %v607 = vmax.f32 %v285, %v563
    %v608 = vmax.f32 %v287, %v566
    %v609 = vmax.f32 %v288, %v568
    %v610 = vmax.f32 %v290, %v571
    %v611 = vmax.f32 %v291, %v573
    %v612 = vmax.f32 %v293, %v576
    %v613 = vmax.f32 %v294, %v578
    %v614 = vmax.f32 %v296, %v581
    %v615 = vmax.f32 %v297, %v583
    %vm616 = vcmask 1045504
    %v617 = vrot.slane %v275, 2
    %v618 = vrot.slane %v276, 2
    %v619 = vsel %vm616, %v617, %v618
    %v620 = vrot.slane %v277, 2
    %v621 = vsel %vm616, %v618, %v620
    %v622 = vrot.slane %v278, 2
    %v623 = vrot.slane %v279, 2
    %v624 = vsel %vm616, %v622, %v623
    %v625 = vrot.slane %v280, 2
    %v626 = vsel %vm616, %v623, %v625
    %v627 = vrot.slane %v281, 2
    %v628 = vrot.slane %v282, 2
    %v629 = vsel %vm616, %v627, %v628
    %v630 = vrot.slane %v283, 2
    %v631 = vsel %vm616, %v628, %v630
    %v632 = vrot.slane %v284, 2
    %v633 = vrot.slane %v285, 2
    %v634 = vsel %vm616, %v632, %v633
    %v635 = vrot.slane %v286, 2
    %v636 = vsel %vm616, %v633, %v635
    %v637 = vrot.slane %v287, 2
    %v638 = vrot.slane %v288, 2
    %v639 = vsel %vm616, %v637, %v638
    %v640 = vrot.slane %v289, 2
    %v641 = vsel %vm616, %v638, %v640
    %v642 = vrot.slane %v290, 2
    %v643 = vrot.slane %v291, 2
    %v644 = vsel %vm616, %v642, %v643
    %v645 = vrot.slane %v292, 2
    %v646 = vsel %vm616, %v643, %v645
    %v647 = vrot.slane %v293, 2
    %v648 = vrot.slane %v294, 2
    %v649 = vsel %vm616, %v647, %v648
    %v650 = vrot.slane %v295, 2
    %v651 = vsel %vm616, %v648, %v650
    %v652 = vrot.slane %v296, 2
    %v653 = vrot.slane %v297, 2
    %v654 = vsel %vm616, %v652, %v653
    %v655 = vrot.slane %v298, 2
    %v656 = vsel %vm616, %v653, %v655
    %v673 = vmax.f32 %v600, %v619
    %v674 = vmax.f32 %v601, %v621
    %v675 = vmax.f32 %v602, %v624
    %v676 = vmax.f32 %v603, %v626
    %v677 = vmax.f32 %v604, %v629
    %v678 = vmax.f32 %v605, %v631
    %v679 = vmax.f32 %v606, %v634
    %v680 = vmax.f32 %v607, %v636
    %v681 = vmax.f32 %v608, %v639
    %v682 = vmax.f32 %v609, %v641
    %v683 = vmax.f32 %v610, %v644
    %v684 = vmax.f32 %v611, %v646
    %v685 = vmax.f32 %v612, %v649
    %v686 = vmax.f32 %v613, %v651
    %v687 = vmax.f32 %v614, %v654
    %v688 = vmax.f32 %v615, %v656
    %vm689 = vcmask 130048
    %v690 = vsel %vm689, %v673, 0.0
    %691 = vadd.xlane.f32.xlu0 %v690
    %v692 = vpop.xlane.xlu0 %691
    %v693 = vsel %vm689, %v674, 0.0
    %694 = vadd.xlane.f32.xlu0 %v693
    %v695 = vpop.xlane.xlu0 %694
    %v696 = vsel %vm689, %v675, 0.0
    %697 = vadd.xlane.f32.xlu0 %v696
    %v698 = vpop.xlane.xlu0 %697
    %v699 = vsel %vm689, %v676, 0.0
    %700 = vadd.xlane.f32.xlu0 %v699
    %v701 = vpop.xlane.xlu0 %700
    %v702 = vsel %vm689, %v677, 0.0
    %703 = vadd.xlane.f32.xlu0 %v702
    %v704 = vpop.xlane.xlu0 %703
    %v705 = vsel %vm689, %v678, 0.0
    %706 = vadd.xlane.f32.xlu0 %v705
    %v707 = vpop.xlane.xlu0 %706
    %v708 = vsel %vm689, %v679, 0.0
    %709 = vadd.xlane.f32.xlu0 %v708
    %v710 = vpop.xlane.xlu0 %709
    %v711 = vsel %vm689, %v680, 0.0
    %712 = vadd.xlane.f32.xlu0 %v711
    %v713 = vpop.xlane.xlu0 %712
    %v714 = vsel %vm689, %v681, 0.0
    %715 = vadd.xlane.f32.xlu0 %v714
    %v716 = vpop.xlane.xlu0 %715
    %v717 = vsel %vm689, %v682, 0.0
    %718 = vadd.xlane.f32.xlu0 %v717
    %v719 = vpop.xlane.xlu0 %718
    %v720 = vsel %vm689, %v683, 0.0
    %721 = vadd.xlane.f32.xlu0 %v720
    %v722 = vpop.xlane.xlu0 %721
    %v723 = vsel %vm689, %v684, 0.0
    %724 = vadd.xlane.f32.xlu0 %v723
    %v725 = vpop.xlane.xlu0 %724
    %v726 = vsel %vm689, %v685, 0.0
    %727 = vadd.xlane.f32.xlu0 %v726
    %v728 = vpop.xlane.xlu0 %727
    %v729 = vsel %vm689, %v686, 0.0
    %730 = vadd.xlane.f32.xlu0 %v729
    %v731 = vpop.xlane.xlu0 %730
    %v732 = vsel %vm689, %v687, 0.0
    %733 = vadd.xlane.f32.xlu0 %v732
    %v734 = vpop.xlane.xlu0 %733
    %v735 = vsel %vm689, %v688, 0.0
    %736 = vadd.xlane.f32.xlu0 %v735
    %v737 = vpop.xlane.xlu0 %736
    %v738 = vadd.f32 %v692, %v695
    %v739 = vrot.slane %v738, 4
    %v740 = vadd.f32 %v738, %v739
    %v741 = vrot.slane %v740, 2
    %v742 = vadd.f32 %v740, %v741
    %v743 = vrot.slane %v742, 1
    %v744 = vadd.f32 %v742, %v743
    %v745 = vadd.f32 %v698, %v701
    %v746 = vrot.slane %v745, 4
    %v747 = vadd.f32 %v745, %v746
    %v748 = vrot.slane %v747, 2
    %v749 = vadd.f32 %v747, %v748
    %v750 = vrot.slane %v749, 1
    %v751 = vadd.f32 %v749, %v750
    %v752 = vadd.f32 %v704, %v707
    %v753 = vrot.slane %v752, 4
    %v754 = vadd.f32 %v752, %v753
    %v755 = vrot.slane %v754, 2
    %v756 = vadd.f32 %v754, %v755
    %v757 = vrot.slane %v756, 1
    %v758 = vadd.f32 %v756, %v757
    %v759 = vadd.f32 %v710, %v713
    %v760 = vrot.slane %v759, 4
    %v761 = vadd.f32 %v759, %v760
    %v762 = vrot.slane %v761, 2
    %v763 = vadd.f32 %v761, %v762
    %v764 = vrot.slane %v763, 1
    %v765 = vadd.f32 %v763, %v764
    %v766 = vadd.f32 %v716, %v719
    %v767 = vrot.slane %v766, 4
    %v768 = vadd.f32 %v766, %v767
    %v769 = vrot.slane %v768, 2
    %v770 = vadd.f32 %v768, %v769
    %v771 = vrot.slane %v770, 1
    %v772 = vadd.f32 %v770, %v771
    %v773 = vadd.f32 %v722, %v725
    %v774 = vrot.slane %v773, 4
    %v775 = vadd.f32 %v773, %v774
    %v776 = vrot.slane %v775, 2
    %v777 = vadd.f32 %v775, %v776
    %v778 = vrot.slane %v777, 1
    %v779 = vadd.f32 %v777, %v778
    %v780 = vadd.f32 %v728, %v731
    %v781 = vrot.slane %v780, 4
    %v782 = vadd.f32 %v780, %v781
    %v783 = vrot.slane %v782, 2
    %v784 = vadd.f32 %v782, %v783
    %v785 = vrot.slane %v784, 1
    %v786 = vadd.f32 %v784, %v785
    %v787 = vadd.f32 %v734, %v737
    %v788 = vrot.slane %v787, 4
    %v789 = vadd.f32 %v787, %v788
    %v790 = vrot.slane %v789, 2
    %v791 = vadd.f32 %v789, %v790
    %v792 = vrot.slane %v791, 1
    %v793 = vadd.f32 %v791, %v792
    %v794 = vadd.f32 %v744, %v751
    %v795 = vadd.f32 %v794, %v758
    %v796 = vadd.f32 %v795, %v765
    %v797 = vadd.f32 %v796, %v772
    %v798 = vadd.f32 %v797, %v779
    %v799 = vadd.f32 %v798, %v786
    %v800 = vadd.f32 %v799, %v793
    %v801 = vsub.f32 2048.0, %v800
    %802 = vst [vmem:[#allocation2] sm:$0xff] %v801
    // Predicated region
    $region6: #{tpu_custom_call.1} parent=1 // pred_check
      _
    $region7: #{tpu_custom_call.1} parent=1 // pred_check_branch
      %804 = sbr.rel (0) target = $region9
    $region8: #{tpu_custom_call.1} parent=1 // pred_region
      _
    $region9: #{tpu_custom_call.1} parent=1 // pred_fallthru
      _
    // Predicated region
    $region10: #{tpu_custom_call.1} parent=1 // pred_check
      _
    $region11: #{tpu_custom_call.1} parent=1 // pred_check_branch
      %806 = sbr.rel (0) target = $region13
    $region12: #{tpu_custom_call.1} parent=1 // pred_region
      %s808 = ssub.s32 128, 128
      %809 = vsyncadd [#allocation3], %s808
      %s811 = sshll.u32 [#allocation2], 4
      %s812 = int_to_ptr.vmem [resolvable:$true] %s811
      %814 = dma.vmem_to_hbm [thread:$0]  %s812, 128, %s2, [#allocation3]
    $region13: #{tpu_custom_call.1} parent=1 // pred_fallthru
      _
    // Predicated region
    $region14: #{tpu_custom_call.1} parent=1 // pred_check
      _
    $region15: #{tpu_custom_call.1} parent=1 // pred_check_branch
      %816 = sbr.rel (0) target = $region17
    $region16: #{tpu_custom_call.1} parent=1 // pred_region
      _
    $region17: #{tpu_custom_call.1} parent=1 // pred_fallthru
      _
    // Predicated region
    $region18: #{tpu_custom_call.1} parent=1 // pred_check
      _
    $region19: #{tpu_custom_call.1} parent=1 // pred_check_branch
      %818 = sbr.rel (0) target = $region21
    $region20: #{tpu_custom_call.1} parent=1 // pred_region
      %819 = dma.done [#allocation3], 128
    $region21: #{tpu_custom_call.1} parent=1 // pred_fallthru
      _
    %820 = vsyncpa [#allocation3], 1

</llo_original>
